<compile_context>
chip_gen: v5e
topology: v5e:2x2
jax: 0.10.0
libtpu: 0.0.40
codegen_flags: <defaults>
</compile_context>

<pallas_src>
import functools
import math

import jax
import jax.numpy as jnp
from jax import lax
from jax.experimental import pallas as pl
from jax.experimental.pallas import tpu as pltpu

_LANE = 128


# ----------------------------------------------------------------------------
# Small helpers: alignment, tile sizing, VMEM budgeting.
# ----------------------------------------------------------------------------
def _round_up(x, m):
    return (x + m - 1) // m * m


def _cdiv(a, b):
    return -(-a // b)


def _min_sublane(dtype):
    # f32 -> 8, bf16 -> 16, int8/fp8 -> 32 (sub-32-bit dtypes pack along sublanes).
    return max(8, 32 // max(1, jnp.dtype(dtype).itemsize))


def _balance_tile(dim, target, quantum):
    """Tile ~<= target (multiple of quantum) that minimizes padding of `dim`."""
    target = max(quantum, min(target, dim))
    splits = _cdiv(dim, target)
    return _round_up(_cdiv(dim, splits), quantum)


def _vmem_bytes(tm, tn, tk, x_bytes, w_bytes, o_bytes, normalize, multi_k,
                buffers):
    """Rough VMEM footprint of one pipelined grid step."""
    u = buffers * tm * tk * x_bytes           # x window(s)
    u += buffers * tk * tn * w_bytes          # weight window(s)
    u += buffers * tm * tn * o_bytes          # output window(s)
    if multi_k:
        u += tm * tn * 4                      # f32 accumulator scratch
    u += 2 << 20                              # bias / inv_norm tiles + internals
    return u


def _default_vmem_budget():
    """Per-TensorCore VMEM budget used when auto-sizing tiles."""
    cap = None
    try:
        cap = getattr(pltpu.get_tpu_info(), "vmem_capacity_bytes", None)
    except Exception:
        cap = None
    if not cap:
        cap = 64 << 20            # conservative: v7x has 64 MiB per TensorCore
    return int(min(cap * 0.6, 80 << 20))


def _choose_tn_tk(Kp128, Np128, x_bytes, w_bytes, o_bytes, normalize, budget,
                  buffers, tn=None, tk=None):
    """Pick output-column and reduction tiles (done once per layer)."""
    tm_assumed = 1024             # worst-case batch tile for the budget check
    tn_auto = tn is None
    tk_auto = tk is None
    if tn_auto:
        tn = _balance_tile(Np128, 2048, _LANE)   # lane-dense output slab
    else:
        tn = _round_up(min(tn, Np128), _LANE)
    if tk_auto:
        tk = Kp128                               # full-K: W streamed from HBM once
    else:
        tk = _round_up(min(tk, Kp128), _LANE)

    def usage(tn_, tk_):
        return _vmem_bytes(tm_assumed, tn_, tk_, x_bytes, w_bytes, o_bytes,
                           normalize, multi_k=(tk_ < Kp128), buffers=buffers)

    # Shrink auto tiles to the VMEM budget: give up full-K first (down to
    # 1024), then narrow the output slab (down to 512), then keep halving.
    while usage(tn, tk) > budget and (tn_auto or tk_auto):
        if tk_auto and tk > 1024:
            tk = _balance_tile(Kp128, tk // 2, _LANE)
        elif tn_auto and tn > 512:
            tn = _balance_tile(Np128, tn // 2, _LANE)
        elif tk_auto and tk > _LANE:
            tk = _balance_tile(Kp128, tk // 2, _LANE)
        elif tn_auto and tn > _LANE:
            tn = _balance_tile(Np128, tn // 2, _LANE)
        else:
            break
    return tn, tk


def _choose_tm(B, tn, tk, multi_k, x_dtype, o_dtype, w_bytes, normalize,
               budget, buffers, tm=None):
    """Pick the batch tile (done per call; depends on the actual batch size)."""
    sub = max(_min_sublane(x_dtype), _min_sublane(o_dtype))
    b_aligned = _round_up(B, sub)
    if tm is not None:
        return min(_round_up(tm, sub), b_aligned)
    xb = jnp.dtype(x_dtype).itemsize
    ob = jnp.dtype(o_dtype).itemsize
    tm_ = _balance_tile(b_aligned, 1024, sub)
    while (tm_ > sub and
           _vmem_bytes(tm_, tn, tk, xb, w_bytes, ob, normalize, multi_k,
                       buffers) > budget):
        tm_ = _balance_tile(b_aligned, tm_ // 2, sub)
    return tm_


# ----------------------------------------------------------------------------
# Kernel.
# ----------------------------------------------------------------------------
def _ff_kernel(x_ref, w_ref, b_ref, *rest, normalize, multi_k):
    if normalize:
        inv_ref = rest[0]
        rest = rest[1:]
    else:
        inv_ref = None
    o_ref = rest[0]
    acc_ref = rest[1] if multi_k else None

    # MXU matmul in the operands' native dtype, f32 accumulation.
    part = jnp.dot(x_ref[...], w_ref[...], preferred_element_type=jnp.float32)

    def _finish(acc):
        y = acc
        if normalize:
            y = y * inv_ref[...]                       # (tm,tn) * (tm,1)
        y = y + b_ref[...].astype(jnp.float32)         # + (1,tn)
        o_ref[...] = jnp.maximum(y, 0.0).astype(o_ref.dtype)

    if not multi_k:
        # Single K step: write straight through, no accumulator round-trip.
        _finish(part)
    else:
        k = pl.program_id(2)

        @pl.when(k == 0)
        def _init():
            acc_ref[...] = jnp.zeros_like(acc_ref)

        acc_ref[...] += part

        @pl.when(k == pl.num_programs(2) - 1)
        def _done():
            _finish(acc_ref[...])


def _ff_pallas_call(xp, wp, bp, invp, *, out_dtype, tm, tn, tk, normalize,
                    vmem_limit_bytes, buffers, cost, interpret):
    Bp, Kp = xp.shape
    Kp_w, Np = wp.shape
    assert Kp == Kp_w
    grid = (Np // tn, Bp // tm, Kp // tk)        # N outer, M middle, K inner
    multi_k = grid[2] > 1

    if buffers != 2:
        x_spec = pl.BlockSpec((tm, tk), lambda n, m, k: (m, k),
                              pipeline_mode=pl.Buffered(buffers))
        w_spec = pl.BlockSpec((tk, tn), lambda n, m, k: (k, n),
                              pipeline_mode=pl.Buffered(buffers))
    else:
        x_spec = pl.BlockSpec((tm, tk), lambda n, m, k: (m, k))
        w_spec = pl.BlockSpec((tk, tn), lambda n, m, k: (k, n))

    in_specs = [x_spec, w_spec,
                pl.BlockSpec((1, tn), lambda n, m, k: (0, n))]     # bias
    inputs = [xp, wp, bp]
    if normalize:
        in_specs.append(pl.BlockSpec((tm, 1), lambda n, m, k: (m, 0)))
        inputs.append(invp)

    scratch = [pltpu.VMEM((tm, tn), jnp.float32)] if multi_k else []

    return pl.pallas_call(
        functools.partial(_ff_kernel, normalize=normalize, multi_k=multi_k),
        out_shape=jax.ShapeDtypeStruct((Bp, Np), out_dtype),
        grid_spec=pltpu.PrefetchScalarGridSpec(
            num_scalar_prefetch=0,
            grid=grid,
            in_specs=in_specs,
            out_specs=pl.BlockSpec((tm, tn), lambda n, m, k: (m, n)),
            scratch_shapes=scratch,
        ),
        compiler_params=pltpu.CompilerParams(
            dimension_semantics=("parallel", "parallel", "arbitrary"),
            vmem_limit_bytes=int(vmem_limit_bytes),
        ),
        cost_estimate=cost,
        interpret=interpret,
    )(*inputs)


# ----------------------------------------------------------------------------
# Layer factory (pads / casts weights once) and convenience wrapper.
# ----------------------------------------------------------------------------
def make_ff_layer(w_t, b, normalize=True, *, tm=None, tn=None, tk=None,
                  mxu_dtype=None, vmem_budget_bytes=None, buffers=2,
                  interpret=False):
    """Build an FFLayer forward fn.  w_t: [in, out], b: [out] or [1, out].

    Weight/bias padding (and the optional bf16 cast for the MXU) happen here,
    once; the returned forward(x) only pads the activation.  Wrap the result
    in jax.jit for repeated use.
    """
    w_t = jnp.asarray(w_t)
    K, N = w_t.shape
    b = jnp.asarray(b).reshape(1, N)
    if mxu_dtype is not None:
        w_t = w_t.astype(mxu_dtype)
    x_dtype_hint = mxu_dtype if mxu_dtype is not None else w_t.dtype

    budget = (_default_vmem_budget()
              if vmem_budget_bytes is None else int(vmem_budget_bytes))

    Kp128 = _round_up(K, _LANE)
    Np128 = _round_up(N, _LANE)
    tn_, tk_ = _choose_tn_tk(
        Kp128, Np128,
        jnp.dtype(x_dtype_hint).itemsize, w_t.dtype.itemsize, 4,
        normalize, budget, buffers, tn=tn, tk=tk)
    Kp = _round_up(Kp128, tk_)
    Np = _round_up(Np128, tn_)
    multi_k = tk_ < Kp

    # One-time zero padding: exact for the matmul, padded cols sliced off.
    wp = jnp.pad(w_t, ((0, Kp - K), (0, Np - N))) if (Kp, Np) != (K, N) else w_t
    bp = jnp.pad(b, ((0, 0), (0, Np - N))) if Np != N else b

    def forward(x):
        x = jnp.asarray(x)
        assert x.shape[-1] == K, f"expected last dim {K}, got {x.shape[-1]}"
        lead = x.shape[:-1]
        out_dtype = x.dtype
        x2 = x.reshape(-1, K)
        B = x2.shape[0]

        inv = None
        if normalize:
            # 1 / max(||x||, 1e-12) == rsqrt(max(||x||^2, 1e-24)), in f32.
            ssq = jnp.sum(jnp.square(x2.astype(jnp.float32)), axis=-1,
                          keepdims=True)
            inv = lax.rsqrt(jnp.maximum(ssq, 1e-24))

        if mxu_dtype is not None and x2.dtype != mxu_dtype:
            x2 = x2.astype(mxu_dtype)

        tm_ = _choose_tm(B, tn_, tk_, multi_k, x2.dtype, out_dtype,
                         wp.dtype.itemsize, normalize, budget, buffers, tm=tm)
        Bp = _round_up(B, tm_)

        if (Bp, Kp) != (B, K):
            x2 = jnp.pad(x2, ((0, Bp - B), (0, Kp - K)))
        if normalize and Bp != B:
            inv = jnp.pad(inv, ((0, Bp - B), (0, 0)))

        gn, gm, gk = Np // tn_, Bp // tm_, Kp // tk_
        w_reads = 1 if gk == 1 else gm          # W block constant over M when K collapses
        cost = pl.CostEstimate(
            flops=2 * Bp * Kp * Np,
            transcendentals=0,
            bytes_accessed=int(
                Bp * Kp * x2.dtype.itemsize * gn
                + Kp * Np * wp.dtype.itemsize * w_reads
                + Bp * Np * jnp.dtype(out_dtype).itemsize
                + Np * bp.dtype.itemsize
                + (Bp * 4 if normalize else 0)),
        )
        usage = _vmem_bytes(tm_, tn_, tk_, x2.dtype.itemsize,
                            wp.dtype.itemsize, jnp.dtype(out_dtype).itemsize,
                            normalize, gk > 1, buffers)
        vmem_limit = max(32 << 20, int(usage) + (8 << 20))

        out = _ff_pallas_call(
            x2, wp, bp, inv, out_dtype=out_dtype, tm=tm_, tn=tn_, tk=tk_,
            normalize=normalize, vmem_limit_bytes=vmem_limit, buffers=buffers,
            cost=cost, interpret=interpret)

        out = out[:B, :N]
        return out.reshape(*lead, N)

    return forward


def ff_layer_forward(x, w_t, b, normalize=True, **kwargs):
    """One-shot convenience wrapper.  For repeated calls (training loops),
    build once with make_ff_layer so weights are padded/cast a single time."""
    return make_ff_layer(w_t, b, normalize=normalize, **kwargs)(x)


# ----------------------------------------------------------------------------
# Init matching FFLayer.__init__ / init_weights, and a pure-JAX reference.
# ----------------------------------------------------------------------------
def init_ff_params(key, in_features, out_features, dtype=jnp.float32):
    """weight: kaiming_uniform_(fan_in, relu) -> U(+-sqrt(6/fan_in));
    bias: torch Linear default -> U(+-1/sqrt(fan_in))."""
    kw, kb = jax.random.split(key)
    bound_w = math.sqrt(6.0 / in_features)
    bound_b = 1.0 / math.sqrt(in_features)
    w = jax.random.uniform(kw, (out_features, in_features), dtype,
                           minval=-bound_w, maxval=bound_w)
    b = jax.random.uniform(kb, (out_features,), dtype,
                           minval=-bound_b, maxval=bound_b)
    return w.T, b.reshape(1, out_features)


def reference_forward(x, w_t, b, normalize=True):
    if normalize:
        x = x / jnp.maximum(
            jnp.sqrt(jnp.sum(x * x, axis=-1, keepdims=True)), 1e-12)
    return jnp.maximum(x @ w_t + b, 0.0)


if __name__ == "__main__":
    key = jax.random.PRNGKey(0)
    k1, k2, k3, k4 = jax.random.split(key, 4)

    # Case 1: aligned shapes, auto tiles (single full-K grid step, no scratch).
    B, K, N = 64, 384, 256
    x = jax.random.normal(k1, (B, K), jnp.float32)
    w_t, b = init_ff_params(k2, K, N)
    fwd = make_ff_layer(w_t, b, normalize=True)
    y = jax.block_until_ready(fwd(x))
    y_ref = reference_forward(x, w_t, b, normalize=True)
    assert y.shape == (B, N)
    assert jnp.allclose(y, y_ref, atol=1e-4, rtol=1e-4)

    # Case 2: explicit small tiles -> multi-tile grid (N=2, M=2, K=3) with the
    # f32 accumulator init/finalize path.
    y2 = jax.block_until_ready(
        ff_layer_forward(x, w_t, b, normalize=True, tm=32, tn=128, tk=128))
    assert jnp.allclose(y2, y_ref, atol=1e-4, rtol=1e-4)

    # normalize=False path on the same tiling.
    y3 = jax.block_until_ready(
        ff_layer_forward(x, w_t, b, normalize=False, tm=32, tn=128, tk=128))
    assert jnp.allclose(y3, reference_forward(x, w_t, b, normalize=False),
                        atol=1e-4, rtol=1e-4)

    # Case 3: ragged shapes exercising row / lane padding.
    B2, K2, N2 = 37, 100, 200
    x2 = jax.random.normal(k3, (B2, K2), jnp.float32)
    w2, b2 = init_ff_params(k4, K2, N2)
    y4 = jax.block_until_ready(ff_layer_forward(x2, w2, b2, normalize=True))
    assert y4.shape == (B2, N2)
    assert jnp.allclose(y4, reference_forward(x2, w2, b2, normalize=True),
                        atol=1e-4, rtol=1e-4)

    # Case 4: bf16 MXU operands (params cast once at layer-build time).
    fwd_bf16 = make_ff_layer(w_t, b, normalize=True, mxu_dtype=jnp.bfloat16)
    y5 = jax.block_until_ready(fwd_bf16(x))
    assert jnp.allclose(y5.astype(jnp.float32), y_ref, atol=1e-2, rtol=1e-2)

    print("KERNEL_OK")
</pallas_src>

<mosaic_0001>
module attributes {stable_mosaic.version = 11 : i64} {
  func.func @_ff_kernel(%arg0: i32, %arg1: i32, %arg2: i32, %arg3: memref<64x384xf32, #tpu.memory_space<vmem>>, %arg4: memref<384x256xf32, #tpu.memory_space<vmem>>, %arg5: memref<1x256xf32, #tpu.memory_space<vmem>>, %arg6: memref<64x1xf32, #tpu.memory_space<vmem>>, %arg7: memref<64x256xf32, #tpu.memory_space<vmem>>) attributes {dimension_semantics = [#tpu.dimension_semantics<parallel>, #tpu.dimension_semantics<parallel>, #tpu.dimension_semantics<arbitrary>], iteration_bounds = array<i64: 1, 1, 1>, scalar_prefetch = 0 : i64, scratch_operands = 0 : i64, tpu.core_type = #tpu.core_type<tc>, window_params = [{transform_indices = @transform_0, window_bounds = array<i64: 64, 384>}, {transform_indices = @transform_1, window_bounds = array<i64: 384, 256>}, {transform_indices = @transform_2, window_bounds = array<i64: 1, 256>}, {transform_indices = @transform_3, window_bounds = array<i64: 64, 1>}, {transform_indices = @transform_4, window_bounds = array<i64: 64, 256>}]} {
    %c0 = arith.constant 0 : index
    %c0_0 = arith.constant 0 : index
    %0 = vector.load %arg3[%c0, %c0_0] : memref<64x384xf32, #tpu.memory_space<vmem>>, vector<64x384xf32>
    %c0_1 = arith.constant 0 : index
    %c0_2 = arith.constant 0 : index
    %1 = vector.load %arg4[%c0_1, %c0_2] : memref<384x256xf32, #tpu.memory_space<vmem>>, vector<384x256xf32>
    %cst = arith.constant dense<0.000000e+00> : vector<64x256xf32>
    %2 = tpu.matmul %0, %1, %cst {dimension_numbers = #tpu.dot_dimension_numbers<[1], [0], [0], [1], [0, 0, 1, 1], [], []>} : vector<64x384xf32>, vector<384x256xf32>, vector<64x256xf32> -> vector<64x256xf32>
    %c0_3 = arith.constant 0 : index
    %c0_4 = arith.constant 0 : index
    %3 = vector.load %arg6[%c0_3, %c0_4] : memref<64x1xf32, #tpu.memory_space<vmem>>, vector<64x1xf32>
    %4 = vector.broadcast %3 : vector<64x1xf32> to vector<64x256xf32>
    %5 = arith.mulf %2, %4 : vector<64x256xf32>
    %c0_5 = arith.constant 0 : index
    %c0_6 = arith.constant 0 : index
    %6 = vector.load %arg5[%c0_5, %c0_6] : memref<1x256xf32, #tpu.memory_space<vmem>>, vector<1x256xf32>
    %7 = vector.broadcast %6 : vector<1x256xf32> to vector<64x256xf32>
    %8 = arith.addf %5, %7 : vector<64x256xf32>
    %cst_7 = arith.constant 0.000000e+00 : f32
    %9 = vector.broadcast %cst_7 : f32 to vector<64x256xf32>
    %10 = arith.maximumf %8, %9 : vector<64x256xf32>
    %c0_8 = arith.constant 0 : index
    %c0_9 = arith.constant 0 : index
    %11 = vector.load %arg7[%c0_8, %c0_9] : memref<64x256xf32, #tpu.memory_space<vmem>>, vector<64x256xf32>
    tpu.vector_store %arg7[%c0_8, %c0_9], %10 {strides = array<i32>} : memref<64x256xf32, #tpu.memory_space<vmem>>, vector<64x256xf32>,
    return
  }
  func.func @transform_0(%arg0: i32, %arg1: i32, %arg2: i32) -> (i32, i32) {
    %c0_i32 = arith.constant 0 : i32
    return %arg1, %arg2 : i32, i32
  }
  func.func @transform_1(%arg0: i32, %arg1: i32, %arg2: i32) -> (i32, i32) {
    %c0_i32 = arith.constant 0 : i32
    return %arg2, %arg0 : i32, i32
  }
  func.func @transform_2(%arg0: i32, %arg1: i32, %arg2: i32) -> (i32, i32) {
    %c0_i32 = arith.constant 0 : i32
    %c0_i32_0 = arith.constant 0 : i32
    return %c0_i32, %arg0 : i32, i32
  }
  func.func @transform_3(%arg0: i32, %arg1: i32, %arg2: i32) -> (i32, i32) {
    %c0_i32 = arith.constant 0 : i32
    %c0_i32_0 = arith.constant 0 : i32
    return %arg1, %c0_i32 : i32, i32
  }
  func.func @transform_4(%arg0: i32, %arg1: i32, %arg2: i32) -> (i32, i32) {
    %c0_i32 = arith.constant 0 : i32
    return %arg1, %arg0 : i32, i32
  }
}

</mosaic_0001>

<llo_original>
// kernel: tpu_custom_call.1
$region0: #{tpu_custom_call.1}
  #allocation0 [shape = 'u32[]', space=smem, size = 0x4, offset = 0x4, fixed_abs, tag = 'smem constant byte address 0x4 - core index']
  #allocation1 [shape = 'u32[72,128]{1,0:T(1,128)}', space=vmem, size = 0x9000, scoped, tag = 'internal scratch']
  %s0 = inlined_call_operand.hbm [shape: f32[64,384], index: 0, kind: input, shape index: {}]
  %s1 = inlined_call_operand.hbm [shape: f32[384,256], index: 1, kind: input, shape index: {}]
  %s2 = inlined_call_operand.vmem [shape: f32[1,256], index: 2, kind: input, shape index: {}]
  %s3 = inlined_call_operand.vmem [shape: f32[64,1], index: 3, kind: input, shape index: {}]
  %s4 = inlined_call_operand.hbm [shape: f32[64,256], index: 4, kind: output, shape index: {}]
  %s5 = sld [smem:[#allocation0]]
  $region34: #{tpu_custom_call.1} parent=0
    _
  %s7 = ssub.s32 1, %s5
  %s8 = scalar_select 0, %s7, %s5
  $region1: #{tpu_custom_call.1} parent=0
    #allocation2 [shape = 'u8[98304]{0}', space=vmem, size = 0x18000, scoped, tag = 'input window, operand 0, single buffered']
    #allocation3 [shape = 's32[1]{0}', space=sflag, size = 0x4, scoped, tag = 'scoped memory for tpu_custom_call.1']
    #allocation4 [shape = 's32[1]{0}', space=sflag, size = 0x4, scoped, tag = 'scoped memory for tpu_custom_call.1']
    #allocation5 [shape = 'u8[393216]{0}', space=vmem, size = 0x60000, scoped, tag = 'input window, operand 1, single buffered']
    #allocation6 [shape = 's32[1]{0}', space=sflag, size = 0x4, scoped, tag = 'scoped memory for tpu_custom_call.1']
    #allocation7 [shape = 'u8[65536]{0}', space=vmem, size = 0x10000, scoped, tag = 'output window, operand 0, single buffered']
    %9 = vsyncpa [#allocation3], 0
    %10 = vsyncpa [#allocation6], 0
    %11 = vsyncpa [#allocation4], 0
    // Predicated region
    $region2: #{tpu_custom_call.1} parent=1 // pred_check
      _
    $region3: #{tpu_custom_call.1} parent=1 // pred_check_branch
      %13 = sbr.rel (0) target = $region5
    $region4: #{tpu_custom_call.1} parent=1 // pred_region
      %15 = vsyncadd [#allocation3], 0
      %s16 = sshll.u32 %s0, 4
      %s17 = int_to_ptr.hbm [resolvable:$true] %s16
      %s18 = sshll.u32 [#allocation2], 4
      %s19 = int_to_ptr.vmem [resolvable:$true] %s18
      %24 = dma.hbm_to_vmem [thread:$0]  %s17, 3072, %s19, [#allocation3], 384, 384, 24
    $region5: #{tpu_custom_call.1} parent=1 // pred_fallthru
      _
    // Predicated region
    $region6: #{tpu_custom_call.1} parent=1 // pred_check
      _
    $region7: #{tpu_custom_call.1} parent=1 // pred_check_branch
      %26 = sbr.rel (0) target = $region9
    $region8: #{tpu_custom_call.1} parent=1 // pred_region
      %28 = vsyncadd [#allocation6], 0
      %s29 = sshll.u32 %s1, 4
      %s30 = int_to_ptr.hbm [resolvable:$true] %s29
      %s31 = sshll.u32 [#allocation5], 4
      %s32 = int_to_ptr.vmem [resolvable:$true] %s31
      %37 = dma.hbm_to_vmem [thread:$0]  %s30, 12288, %s32, [#allocation6], 256, 256, 16
    $region9: #{tpu_custom_call.1} parent=1 // pred_fallthru
      _
    // Predicated region
    $region10: #{tpu_custom_call.1} parent=1 // pred_check
      _
    $region11: #{tpu_custom_call.1} parent=1 // pred_check_branch
      %39 = sbr.rel (0) target = $region13
    $region12: #{tpu_custom_call.1} parent=1 // pred_region
      _
    $region13: #{tpu_custom_call.1} parent=1 // pred_fallthru
      _
    // Predicated region
    $region14: #{tpu_custom_call.1} parent=1 // pred_check
      _
    $region15: #{tpu_custom_call.1} parent=1 // pred_check_branch
      %41 = sbr.rel (0) target = $region17
    $region16: #{tpu_custom_call.1} parent=1 // pred_region
      _
    $region17: #{tpu_custom_call.1} parent=1 // pred_fallthru
      _
    // Predicated region
    $region18: #{tpu_custom_call.1} parent=1 // pred_check
      _
    $region19: #{tpu_custom_call.1} parent=1 // pred_check_branch
      %43 = sbr.rel (0) target = $region21
    $region20: #{tpu_custom_call.1} parent=1 // pred_region
      %45 = dma.done [#allocation3], 3072
    $region21: #{tpu_custom_call.1} parent=1 // pred_fallthru
      _
    // Predicated region
    $region22: #{tpu_custom_call.1} parent=1 // pred_check
      _
    $region23: #{tpu_custom_call.1} parent=1 // pred_check_branch
      %47 = sbr.rel (0) target = $region25
    $region24: #{tpu_custom_call.1} parent=1 // pred_region
      %49 = dma.done [#allocation6], 12288
    $region25: #{tpu_custom_call.1} parent=1 // pred_fallthru
      _
    %v50 = vld [vmem:[#allocation2] sm:$0xff]
    %v51 = vld [vmem:[#allocation2 + $0x8] sm:$0xff]
    %v52 = vld [vmem:[#allocation2 + $0x10] sm:$0xff]
    %v53 = vld [vmem:[#allocation2 + $0x18] sm:$0xff]
    %v54 = vld [vmem:[#allocation2 + $0x20] sm:$0xff]
    %v55 = vld [vmem:[#allocation2 + $0x28] sm:$0xff]
    %v56 = vld [vmem:[#allocation2 + $0x30] sm:$0xff]
    %v57 = vld [vmem:[#allocation2 + $0x38] sm:$0xff]
    %v58 = vld [vmem:[#allocation2 + $0x40] sm:$0xff]
    %v59 = vld [vmem:[#allocation2 + $0x48] sm:$0xff]
    %v60 = vld [vmem:[#allocation2 + $0x50] sm:$0xff]
    %v61 = vld [vmem:[#allocation2 + $0x58] sm:$0xff]
    %v62 = vld [vmem:[#allocation2 + $0x60] sm:$0xff]
    %v63 = vld [vmem:[#allocation2 + $0x68] sm:$0xff]
    %v64 = vld [vmem:[#allocation2 + $0x70] sm:$0xff]
    %v65 = vld [vmem:[#allocation2 + $0x78] sm:$0xff]
    %v66 = vld [vmem:[#allocation2 + $0x80] sm:$0xff]
    %v67 = vld [vmem:[#allocation2 + $0x88] sm:$0xff]
    %v68 = vld [vmem:[#allocation2 + $0x90] sm:$0xff]
    %v69 = vld [vmem:[#allocation2 + $0x98] sm:$0xff]
    %v70 = vld [vmem:[#allocation2 + $0xa0] sm:$0xff]
    %v71 = vld [vmem:[#allocation2 + $0xa8] sm:$0xff]
    %v72 = vld [vmem:[#allocation2 + $0xb0] sm:$0xff]
    %v73 = vld [vmem:[#allocation2 + $0xb8] sm:$0xff]
    %v74 = vld [vmem:[#allocation5] sm:$0xff]
    %v75 = vld [vmem:[#allocation5 + $0x8] sm:$0xff]
    %v76 = vld [vmem:[#allocation5 + $0x10] sm:$0xff]
    %v77 = vld [vmem:[#allocation5 + $0x18] sm:$0xff]
    %v78 = vld [vmem:[#allocation5 + $0x20] sm:$0xff]
    %v79 = vld [vmem:[#allocation5 + $0x28] sm:$0xff]
    %v80 = vld [vmem:[#allocation5 + $0x30] sm:$0xff]
    %v81 = vld [vmem:[#allocation5 + $0x38] sm:$0xff]
    %v82 = vld [vmem:[#allocation5 + $0x40] sm:$0xff]
    %v83 = vld [vmem:[#allocation5 + $0x48] sm:$0xff]
    %v84 = vld [vmem:[#allocation5 + $0x50] sm:$0xff]
    %v85 = vld [vmem:[#allocation5 + $0x58] sm:$0xff]
    %v86 = vld [vmem:[#allocation5 + $0x60] sm:$0xff]
    %v87 = vld [vmem:[#allocation5 + $0x68] sm:$0xff]
    %v88 = vld [vmem:[#allocation5 + $0x70] sm:$0xff]
    %v89 = vld [vmem:[#allocation5 + $0x78] sm:$0xff]
    %v90 = vld [vmem:[#allocation5 + $0x80] sm:$0xff]
    %v91 = vld [vmem:[#allocation5 + $0x88] sm:$0xff]
    %v92 = vld [vmem:[#allocation5 + $0x90] sm:$0xff]
    %v93 = vld [vmem:[#allocation5 + $0x98] sm:$0xff]
    %v94 = vld [vmem:[#allocation5 + $0xa0] sm:$0xff]
    %v95 = vld [vmem:[#allocation5 + $0xa8] sm:$0xff]
    %v96 = vld [vmem:[#allocation5 + $0xb0] sm:$0xff]
    %v97 = vld [vmem:[#allocation5 + $0xb8] sm:$0xff]
    %v98 = vld [vmem:[#allocation5 + $0xc0] sm:$0xff]
    %v99 = vld [vmem:[#allocation5 + $0xc8] sm:$0xff]
    %v100 = vld [vmem:[#allocation5 + $0xd0] sm:$0xff]
    %v101 = vld [vmem:[#allocation5 + $0xd8] sm:$0xff]
    %v102 = vld [vmem:[#allocation5 + $0xe0] sm:$0xff]
    %v103 = vld [vmem:[#allocation5 + $0xe8] sm:$0xff]
    %v104 = vld [vmem:[#allocation5 + $0xf0] sm:$0xff]
    %v105 = vld [vmem:[#allocation5 + $0xf8] sm:$0xff]
    %v106 = vld [vmem:[#allocation5 + $0x100] sm:$0xff]
    %v107 = vld [vmem:[#allocation5 + $0x108] sm:$0xff]
    %v108 = vld [vmem:[#allocation5 + $0x110] sm:$0xff]
    %v109 = vld [vmem:[#allocation5 + $0x118] sm:$0xff]
    %v110 = vld [vmem:[#allocation5 + $0x120] sm:$0xff]
    %v111 = vld [vmem:[#allocation5 + $0x128] sm:$0xff]
    %v112 = vld [vmem:[#allocation5 + $0x130] sm:$0xff]
    %v113 = vld [vmem:[#allocation5 + $0x138] sm:$0xff]
    %v114 = vld [vmem:[#allocation5 + $0x140] sm:$0xff]
    %v115 = vld [vmem:[#allocation5 + $0x148] sm:$0xff]
    %v116 = vld [vmem:[#allocation5 + $0x150] sm:$0xff]
    %v117 = vld [vmem:[#allocation5 + $0x158] sm:$0xff]
    %v118 = vld [vmem:[#allocation5 + $0x160] sm:$0xff]
    %v119 = vld [vmem:[#allocation5 + $0x168] sm:$0xff]
    %v120 = vld [vmem:[#allocation5 + $0x170] sm:$0xff]
    %v121 = vld [vmem:[#allocation5 + $0x178] sm:$0xff]
    %v122 = vld [vmem:[#allocation5 + $0x180] sm:$0xff]
    %v123 = vld [vmem:[#allocation5 + $0x188] sm:$0xff]
    %v124 = vld [vmem:[#allocation5 + $0x190] sm:$0xff]
    %v125 = vld [vmem:[#allocation5 + $0x198] sm:$0xff]
    %v126 = vld [vmem:[#allocation5 + $0x1a0] sm:$0xff]
    %v127 = vld [vmem:[#allocation5 + $0x1a8] sm:$0xff]
    %v128 = vld [vmem:[#allocation5 + $0x1b0] sm:$0xff]
    %v129 = vld [vmem:[#allocation5 + $0x1b8] sm:$0xff]
    %v130 = vld [vmem:[#allocation5 + $0x1c0] sm:$0xff]
    %v131 = vld [vmem:[#allocation5 + $0x1c8] sm:$0xff]
    %v132 = vld [vmem:[#allocation5 + $0x1d0] sm:$0xff]
    %v133 = vld [vmem:[#allocation5 + $0x1d8] sm:$0xff]
    %v134 = vld [vmem:[#allocation5 + $0x1e0] sm:$0xff]
    %v135 = vld [vmem:[#allocation5 + $0x1e8] sm:$0xff]
    %v136 = vld [vmem:[#allocation5 + $0x1f0] sm:$0xff]
    %v137 = vld [vmem:[#allocation5 + $0x1f8] sm:$0xff]
    %v138 = vld [vmem:[#allocation5 + $0x200] sm:$0xff]
    %v139 = vld [vmem:[#allocation5 + $0x208] sm:$0xff]
    %v140 = vld [vmem:[#allocation5 + $0x210] sm:$0xff]
    %v141 = vld [vmem:[#allocation5 + $0x218] sm:$0xff]
    %v142 = vld [vmem:[#allocation5 + $0x220] sm:$0xff]
    %v143 = vld [vmem:[#allocation5 + $0x228] sm:$0xff]
    %v144 = vld [vmem:[#allocation5 + $0x230] sm:$0xff]
    %v145 = vld [vmem:[#allocation5 + $0x238] sm:$0xff]
    %v146 = vld [vmem:[#allocation5 + $0x240] sm:$0xff]
    %v147 = vld [vmem:[#allocation5 + $0x248] sm:$0xff]
    %v148 = vld [vmem:[#allocation5 + $0x250] sm:$0xff]
    %v149 = vld [vmem:[#allocation5 + $0x258] sm:$0xff]
    %v150 = vld [vmem:[#allocation5 + $0x260] sm:$0xff]
    %v151 = vld [vmem:[#allocation5 + $0x268] sm:$0xff]
    %v152 = vld [vmem:[#allocation5 + $0x270] sm:$0xff]
    %v153 = vld [vmem:[#allocation5 + $0x278] sm:$0xff]
    %v154 = vld [vmem:[#allocation5 + $0x280] sm:$0xff]
    %v155 = vld [vmem:[#allocation5 + $0x288] sm:$0xff]
    %v156 = vld [vmem:[#allocation5 + $0x290] sm:$0xff]
    %v157 = vld [vmem:[#allocation5 + $0x298] sm:$0xff]
    %v158 = vld [vmem:[#allocation5 + $0x2a0] sm:$0xff]
    %v159 = vld [vmem:[#allocation5 + $0x2a8] sm:$0xff]
    %v160 = vld [vmem:[#allocation5 + $0x2b0] sm:$0xff]
    %v161 = vld [vmem:[#allocation5 + $0x2b8] sm:$0xff]
    %v162 = vld [vmem:[#allocation5 + $0x2c0] sm:$0xff]
    %v163 = vld [vmem:[#allocation5 + $0x2c8] sm:$0xff]
    %v164 = vld [vmem:[#allocation5 + $0x2d0] sm:$0xff]
    %v165 = vld [vmem:[#allocation5 + $0x2d8] sm:$0xff]
    %v166 = vld [vmem:[#allocation5 + $0x2e0] sm:$0xff]
    %v167 = vld [vmem:[#allocation5 + $0x2e8] sm:$0xff]
    %v168 = vld [vmem:[#allocation5 + $0x2f0] sm:$0xff]
    %v169 = vld [vmem:[#allocation5 + $0x2f8] sm:$0xff]
    %170 = vmatpush.msra.mxu0 %v104
    %171 = vmatpush.msra.mxu0 %v102
    %172 = vmatpush.msra.mxu0 %v100
    %173 = vmatpush.msra.mxu0 %v98
    %174 = vmatpush.msra.mxu0 %v96
    %175 = vmatpush.msra.mxu0 %v94
    %176 = vmatpush.msra.mxu0 %v92
    %177 = vmatpush.msra.mxu0 %v90
    %178 = vmatpush.msra.mxu0 %v88
    %179 = vmatpush.msra.mxu0 %v86
    %180 = vmatpush.msra.mxu0 %v84
    %181 = vmatpush.msra.mxu0 %v82
    %182 = vmatpush.msra.mxu0 %v80
    %183 = vmatpush.msra.mxu0 %v78
    %184 = vmatpush.msra.mxu0 %v76
    %185 = vmatpush.msra.mxu0 %v74
    %186 = vmatmul.f32.gmra.mxu0 %v50
    %v187 = vpop.f32.mrf.mxu0
    %v188 = vadd.f32 0.0, %v187
    %189 = vmatmul.f32.gmra.mxu0 %v53
    %v190 = vpop.f32.mrf.mxu0
    %v191 = vadd.f32 0.0, %v190
    %192 = vmatmul.f32.gmra.mxu0 %v56
    %v193 = vpop.f32.mrf.mxu0
    %v194 = vadd.f32 0.0, %v193
    %195 = vmatmul.f32.gmra.mxu0 %v59
    %v196 = vpop.f32.mrf.mxu0
    %v197 = vadd.f32 0.0, %v196
    %198 = vmatmul.f32.gmra.mxu0 %v62
    %v199 = vpop.f32.mrf.mxu0
    %v200 = vadd.f32 0.0, %v199
    %201 = vmatmul.f32.gmra.mxu0 %v65
    %v202 = vpop.f32.mrf.mxu0
    %v203 = vadd.f32 0.0, %v202
    %204 = vmatmul.f32.gmra.mxu0 %v68
    %v205 = vpop.f32.mrf.mxu0
    %v206 = vadd.f32 0.0, %v205
    %207 = vmatmul.f32.gmra.mxu0 %v71
    %v208 = vpop.f32.mrf.mxu0
    %v209 = vadd.f32 0.0, %v208
    %210 = vdwg.mxu0
    %211 = vmatpush.msra.mxu0 %v136
    %212 = vmatpush.msra.mxu0 %v134
    %213 = vmatpush.msra.mxu0 %v132
    %214 = vmatpush.msra.mxu0 %v130
    %215 = vmatpush.msra.mxu0 %v128
    %216 = vmatpush.msra.mxu0 %v126
    %217 = vmatpush.msra.mxu0 %v124
    %218 = vmatpush.msra.mxu0 %v122
    %219 = vmatpush.msra.mxu0 %v120
    %220 = vmatpush.msra.mxu0 %v118
    %221 = vmatpush.msra.mxu0 %v116
    %222 = vmatpush.msra.mxu0 %v114
    %223 = vmatpush.msra.mxu0 %v112
    %224 = vmatpush.msra.mxu0 %v110
    %225 = vmatpush.msra.mxu0 %v108
    %226 = vmatpush.msra.mxu0 %v106
    %227 = vmatmul.f32.gmra.mxu0 %v51
    %v228 = vpop.f32.mrf.mxu0
    %v229 = vadd.f32 %v188, %v228
    %230 = vmatmul.f32.gmra.mxu0 %v54
    %v231 = vpop.f32.mrf.mxu0
    %v232 = vadd.f32 %v191, %v231
    %233 = vmatmul.f32.gmra.mxu0 %v57
    %v234 = vpop.f32.mrf.mxu0
    %v235 = vadd.f32 %v194, %v234
    %236 = vmatmul.f32.gmra.mxu0 %v60
    %v237 = vpop.f32.mrf.mxu0
    %v238 = vadd.f32 %v197, %v237
    %239 = vmatmul.f32.gmra.mxu0 %v63
    %v240 = vpop.f32.mrf.mxu0
    %v241 = vadd.f32 %v200, %v240
    %242 = vmatmul.f32.gmra.mxu0 %v66
    %v243 = vpop.f32.mrf.mxu0
    %v244 = vadd.f32 %v203, %v243
    %245 = vmatmul.f32.gmra.mxu0 %v69
    %v246 = vpop.f32.mrf.mxu0
    %v247 = vadd.f32 %v206, %v246
    %248 = vmatmul.f32.gmra.mxu0 %v72
    %v249 = vpop.f32.mrf.mxu0
    %v250 = vadd.f32 %v209, %v249
    %251 = vdwg.mxu0
    %252 = vmatpush.msra.mxu0 %v168
    %253 = vmatpush.msra.mxu0 %v166
    %254 = vmatpush.msra.mxu0 %v164
    %255 = vmatpush.msra.mxu0 %v162
    %256 = vmatpush.msra.mxu0 %v160
    %257 = vmatpush.msra.mxu0 %v158
    %258 = vmatpush.msra.mxu0 %v156
    %259 = vmatpush.msra.mxu0 %v154
    %260 = vmatpush.msra.mxu0 %v152
    %261 = vmatpush.msra.mxu0 %v150
    %262 = vmatpush.msra.mxu0 %v148
    %263 = vmatpush.msra.mxu0 %v146
    %264 = vmatpush.msra.mxu0 %v144
    %265 = vmatpush.msra.mxu0 %v142
    %266 = vmatpush.msra.mxu0 %v140
    %267 = vmatpush.msra.mxu0 %v138
    %268 = vmatmul.f32.gmra.mxu0 %v52
    %v269 = vpop.f32.mrf.mxu0
    %v270 = vadd.f32 %v229, %v269
    %271 = vmatmul.f32.gmra.mxu0 %v55
    %v272 = vpop.f32.mrf.mxu0
    %v273 = vadd.f32 %v232, %v272
    %274 = vmatmul.f32.gmra.mxu0 %v58
    %v275 = vpop.f32.mrf.mxu0
    %v276 = vadd.f32 %v235, %v275
    %277 = vmatmul.f32.gmra.mxu0 %v61
    %v278 = vpop.f32.mrf.mxu0
    %v279 = vadd.f32 %v238, %v278
    %280 = vmatmul.f32.gmra.mxu0 %v64
    %v281 = vpop.f32.mrf.mxu0
    %v282 = vadd.f32 %v241, %v281
    %283 = vmatmul.f32.gmra.mxu0 %v67
    %v284 = vpop.f32.mrf.mxu0
    %v285 = vadd.f32 %v244, %v284
    %286 = vmatmul.f32.gmra.mxu0 %v70
    %v287 = vpop.f32.mrf.mxu0
    %v288 = vadd.f32 %v247, %v287
    %289 = vmatmul.f32.gmra.mxu0 %v73
    %v290 = vpop.f32.mrf.mxu0
    %v291 = vadd.f32 %v250, %v290
    %292 = vdwg.mxu0
    %293 = vmatpush.msra.mxu0 %v105
    %294 = vmatpush.msra.mxu0 %v103
    %295 = vmatpush.msra.mxu0 %v101
    %296 = vmatpush.msra.mxu0 %v99
    %297 = vmatpush.msra.mxu0 %v97
    %298 = vmatpush.msra.mxu0 %v95
    %299 = vmatpush.msra.mxu0 %v93
    %300 = vmatpush.msra.mxu0 %v91
    %301 = vmatpush.msra.mxu0 %v89
    %302 = vmatpush.msra.mxu0 %v87
    %303 = vmatpush.msra.mxu0 %v85
    %304 = vmatpush.msra.mxu0 %v83
    %305 = vmatpush.msra.mxu0 %v81
    %306 = vmatpush.msra.mxu0 %v79
    %307 = vmatpush.msra.mxu0 %v77
    %308 = vmatpush.msra.mxu0 %v75
    %309 = vmatmul.f32.gmra.mxu0 %v50
    %v310 = vpop.f32.mrf.mxu0
    %v311 = vadd.f32 0.0, %v310
    %312 = vmatmul.f32.gmra.mxu0 %v53
    %v313 = vpop.f32.mrf.mxu0
    %v314 = vadd.f32 0.0, %v313
    %315 = vmatmul.f32.gmra.mxu0 %v56
    %v316 = vpop.f32.mrf.mxu0
    %v317 = vadd.f32 0.0, %v316
    %318 = vmatmul.f32.gmra.mxu0 %v59
    %v319 = vpop.f32.mrf.mxu0
    %v320 = vadd.f32 0.0, %v319
    %321 = vmatmul.f32.gmra.mxu0 %v62
    %v322 = vpop.f32.mrf.mxu0
    %v323 = vadd.f32 0.0, %v322
    %324 = vmatmul.f32.gmra.mxu0 %v65
    %v325 = vpop.f32.mrf.mxu0
    %v326 = vadd.f32 0.0, %v325
    %327 = vmatmul.f32.gmra.mxu0 %v68
    %v328 = vpop.f32.mrf.mxu0
    %v329 = vadd.f32 0.0, %v328
    %330 = vmatmul.f32.gmra.mxu0 %v71
    %v331 = vpop.f32.mrf.mxu0
    %v332 = vadd.f32 0.0, %v331
    %333 = vdwg.mxu0
    %334 = vmatpush.msra.mxu0 %v137
    %335 = vmatpush.msra.mxu0 %v135
    %336 = vmatpush.msra.mxu0 %v133
    %337 = vmatpush.msra.mxu0 %v131
    %338 = vmatpush.msra.mxu0 %v129
    %339 = vmatpush.msra.mxu0 %v127
    %340 = vmatpush.msra.mxu0 %v125
    %341 = vmatpush.msra.mxu0 %v123
    %342 = vmatpush.msra.mxu0 %v121
    %343 = vmatpush.msra.mxu0 %v119
    %344 = vmatpush.msra.mxu0 %v117
    %345 = vmatpush.msra.mxu0 %v115
    %346 = vmatpush.msra.mxu0 %v113
    %347 = vmatpush.msra.mxu0 %v111
    %348 = vmatpush.msra.mxu0 %v109
    %349 = vmatpush.msra.mxu0 %v107
    %350 = vmatmul.f32.gmra.mxu0 %v51
    %v351 = vpop.f32.mrf.mxu0
    %v352 = vadd.f32 %v311, %v351
    %353 = vmatmul.f32.gmra.mxu0 %v54
    %v354 = vpop.f32.mrf.mxu0
    %v355 = vadd.f32 %v314, %v354
    %356 = vmatmul.f32.gmra.mxu0 %v57
    %v357 = vpop.f32.mrf.mxu0
    %v358 = vadd.f32 %v317, %v357
    %359 = vmatmul.f32.gmra.mxu0 %v60
    %v360 = vpop.f32.mrf.mxu0
    %v361 = vadd.f32 %v320, %v360
    %362 = vmatmul.f32.gmra.mxu0 %v63
    %v363 = vpop.f32.mrf.mxu0
    %v364 = vadd.f32 %v323, %v363
    %365 = vmatmul.f32.gmra.mxu0 %v66
    %v366 = vpop.f32.mrf.mxu0
    %v367 = vadd.f32 %v326, %v366
    %368 = vmatmul.f32.gmra.mxu0 %v69
    %v369 = vpop.f32.mrf.mxu0
    %v370 = vadd.f32 %v329, %v369
    %371 = vmatmul.f32.gmra.mxu0 %v72
    %v372 = vpop.f32.mrf.mxu0
    %v373 = vadd.f32 %v332, %v372
    %374 = vdwg.mxu0
    %375 = vmatpush.msra.mxu0 %v169
    %376 = vmatpush.msra.mxu0 %v167
    %377 = vmatpush.msra.mxu0 %v165
    %378 = vmatpush.msra.mxu0 %v163
    %379 = vmatpush.msra.mxu0 %v161
    %380 = vmatpush.msra.mxu0 %v159
    %381 = vmatpush.msra.mxu0 %v157
    %382 = vmatpush.msra.mxu0 %v155
    %383 = vmatpush.msra.mxu0 %v153
    %384 = vmatpush.msra.mxu0 %v151
    %385 = vmatpush.msra.mxu0 %v149
    %386 = vmatpush.msra.mxu0 %v147
    %387 = vmatpush.msra.mxu0 %v145
    %388 = vmatpush.msra.mxu0 %v143
    %389 = vmatpush.msra.mxu0 %v141
    %390 = vmatpush.msra.mxu0 %v139
    %391 = vmatmul.f32.gmra.mxu0 %v52
    %v392 = vpop.f32.mrf.mxu0
    %v393 = vadd.f32 %v352, %v392
    %394 = vmatmul.f32.gmra.mxu0 %v55
    %v395 = vpop.f32.mrf.mxu0
    %v396 = vadd.f32 %v355, %v395
    %397 = vmatmul.f32.gmra.mxu0 %v58
    %v398 = vpop.f32.mrf.mxu0
    %v399 = vadd.f32 %v358, %v398
    %400 = vmatmul.f32.gmra.mxu0 %v61
    %v401 = vpop.f32.mrf.mxu0
    %v402 = vadd.f32 %v361, %v401
    %403 = vmatmul.f32.gmra.mxu0 %v64
    %v404 = vpop.f32.mrf.mxu0
    %v405 = vadd.f32 %v364, %v404
    %406 = vmatmul.f32.gmra.mxu0 %v67
    %v407 = vpop.f32.mrf.mxu0
    %v408 = vadd.f32 %v367, %v407
    %409 = vmatmul.f32.gmra.mxu0 %v70
    %v410 = vpop.f32.mrf.mxu0
    %v411 = vadd.f32 %v370, %v410
    %412 = vmatmul.f32.gmra.mxu0 %v73
    %v413 = vpop.f32.mrf.mxu0
    %v414 = vadd.f32 %v373, %v413
    %415 = vdwg.mxu0
    %v416 = vld [vmem:[%s3] sm:$0xff]
    %v417 = vld [vmem:[%s3 + $0x8] sm:$0xff]
    %v418 = vld [vmem:[%s3 + $0x10] sm:$0xff]
    %v419 = vld [vmem:[%s3 + $0x18] sm:$0xff]
    %v420 = vld [vmem:[%s3 + $0x20] sm:$0xff]
    %v421 = vld [vmem:[%s3 + $0x28] sm:$0xff]
    %v422 = vld [vmem:[%s3 + $0x30] sm:$0xff]
    %v423 = vld [vmem:[%s3 + $0x38] sm:$0xff]
    %425 = vset.pattern.permute.xlu0 0
    %426 = vperm.xlu0 %425, %v416
    %v427 = vpop.permute.xlu0 %426
    %430 = vset.pattern.permute.xlu0 0
    %431 = vperm.xlu0 %430, %v417
    %v432 = vpop.permute.xlu0 %431
    %435 = vset.pattern.permute.xlu0 0
    %436 = vperm.xlu0 %435, %v418
    %v437 = vpop.permute.xlu0 %436
    %440 = vset.pattern.permute.xlu0 0
    %441 = vperm.xlu0 %440, %v419
    %v442 = vpop.permute.xlu0 %441
    %445 = vset.pattern.permute.xlu0 0
    %446 = vperm.xlu0 %445, %v420
    %v447 = vpop.permute.xlu0 %446
    %450 = vset.pattern.permute.xlu0 0
    %451 = vperm.xlu0 %450, %v421
    %v452 = vpop.permute.xlu0 %451
    %455 = vset.pattern.permute.xlu0 0
    %456 = vperm.xlu0 %455, %v422
    %v457 = vpop.permute.xlu0 %456
    %460 = vset.pattern.permute.xlu0 0
    %461 = vperm.xlu0 %460, %v423
    %v462 = vpop.permute.xlu0 %461
    %v464 = vmul.f32 %v270, %v427
    %v465 = vmul.f32 %v393, %v427
    %v466 = vmul.f32 %v273, %v432
    %v467 = vmul.f32 %v396, %v432
    %v468 = vmul.f32 %v276, %v437
    %v469 = vmul.f32 %v399, %v437
    %v470 = vmul.f32 %v279, %v442
    %v471 = vmul.f32 %v402, %v442
    %v472 = vmul.f32 %v282, %v447
    %v473 = vmul.f32 %v405, %v447
    %v474 = vmul.f32 %v285, %v452
    %v475 = vmul.f32 %v408, %v452
    %v476 = vmul.f32 %v288, %v457
    %v477 = vmul.f32 %v411, %v457
    %v478 = vmul.f32 %v291, %v462
    %v479 = vmul.f32 %v414, %v462
    %v480 = vld [vmem:[%s2] sm:$0x3]
    %v482 = vperm.slane %v480, 0
    %v483 = vperm.slane %v480, 1
    %v486 = vadd.f32 %v464, %v482
    %v487 = vadd.f32 %v465, %v483
    %v488 = vadd.f32 %v466, %v482
    %v489 = vadd.f32 %v467, %v483
    %v490 = vadd.f32 %v468, %v482
    %v491 = vadd.f32 %v469, %v483
    %v492 = vadd.f32 %v470, %v482
    %v493 = vadd.f32 %v471, %v483
    %v494 = vadd.f32 %v472, %v482
    %v495 = vadd.f32 %v473, %v483
    %v496 = vadd.f32 %v474, %v482
    %v497 = vadd.f32 %v475, %v483
    %v498 = vadd.f32 %v476, %v482
    %v499 = vadd.f32 %v477, %v483
    %v500 = vadd.f32 %v478, %v482
    %v501 = vadd.f32 %v479, %v483
    %v502 = vmax.f32 %v486, 0.0
    %v503 = vmax.f32 %v487, 0.0
    %v504 = vmax.f32 %v488, 0.0
    %v505 = vmax.f32 %v489, 0.0
    %v506 = vmax.f32 %v490, 0.0
    %v507 = vmax.f32 %v491, 0.0
    %v508 = vmax.f32 %v492, 0.0
    %v509 = vmax.f32 %v493, 0.0
    %v510 = vmax.f32 %v494, 0.0
    %v511 = vmax.f32 %v495, 0.0
    %v512 = vmax.f32 %v496, 0.0
    %v513 = vmax.f32 %v497, 0.0
    %v514 = vmax.f32 %v498, 0.0
    %v515 = vmax.f32 %v499, 0.0
    %v516 = vmax.f32 %v500, 0.0
    %v517 = vmax.f32 %v501, 0.0
    %518 = vst [vmem:[#allocation7] sm:$0xff] %v502
    %519 = vst [vmem:[#allocation7 + $0x8] sm:$0xff] %v503
    %520 = vst [vmem:[#allocation7 + $0x10] sm:$0xff] %v504
    %521 = vst [vmem:[#allocation7 + $0x18] sm:$0xff] %v505
    %522 = vst [vmem:[#allocation7 + $0x20] sm:$0xff] %v506
    %523 = vst [vmem:[#allocation7 + $0x28] sm:$0xff] %v507
    %524 = vst [vmem:[#allocation7 + $0x30] sm:$0xff] %v508
    %525 = vst [vmem:[#allocation7 + $0x38] sm:$0xff] %v509
    %526 = vst [vmem:[#allocation7 + $0x40] sm:$0xff] %v510
    %527 = vst [vmem:[#allocation7 + $0x48] sm:$0xff] %v511
    %528 = vst [vmem:[#allocation7 + $0x50] sm:$0xff] %v512
    %529 = vst [vmem:[#allocation7 + $0x58] sm:$0xff] %v513
    %530 = vst [vmem:[#allocation7 + $0x60] sm:$0xff] %v514
    %531 = vst [vmem:[#allocation7 + $0x68] sm:$0xff] %v515
    %532 = vst [vmem:[#allocation7 + $0x70] sm:$0xff] %v516
    %533 = vst [vmem:[#allocation7 + $0x78] sm:$0xff] %v517
    // Predicated region
    $region26: #{tpu_custom_call.1} parent=1 // pred_check
      _
    $region27: #{tpu_custom_call.1} parent=1 // pred_check_branch
      %535 = sbr.rel (0) target = $region29
    $region28: #{tpu_custom_call.1} parent=1 // pred_region
      %537 = vsyncadd [#allocation4], 0
      %s538 = sshll.u32 [#allocation7], 4
      %s539 = int_to_ptr.vmem [resolvable:$true] %s538
      %s540 = sshll.u32 %s4, 4
      %s541 = int_to_ptr.hbm [resolvable:$true] %s540
      %546 = dma.vmem_to_hbm [thread:$0]  %s539, 2048, %s541, [#allocation4], 256, 256, 16
    $region29: #{tpu_custom_call.1} parent=1 // pred_fallthru
      _
    // Predicated region
    $region30: #{tpu_custom_call.1} parent=1 // pred_check
      _
    $region31: #{tpu_custom_call.1} parent=1 // pred_check_branch
      %548 = sbr.rel (0) target = $region33
    $region32: #{tpu_custom_call.1} parent=1 // pred_region
      %550 = dma.done [#allocation4], 2048
    $region33: #{tpu_custom_call.1} parent=1 // pred_fallthru
      _
    %551 = vsyncpa [#allocation3], 1
    %552 = vsyncpa [#allocation6], 1
    %553 = vsyncpa [#allocation4], 1

</llo_original>
